<compile_context>
chip_gen: v5e
topology: v5e:2x2
jax: 0.10.0
libtpu: 0.0.40
codegen_flags: <defaults>
</compile_context>

<pallas_src>
import jax
import jax.numpy as jnp
from jax.experimental import pallas as pl
from jax.experimental.pallas import tpu as pltpu


def _conv1d_glu_kernel(x_ref, w_ref, b_ref, o_ref):
    """x_ref/o_ref: (bt, C, T) NCW blocks; w_ref: (2O, K*C) tap-major; b_ref: (2O, 1)."""
    bt, C, T = x_ref.shape
    two_o, KC = w_ref.shape
    K = KC // C
    O = two_o // 2
    pad = (K - 1) // 2

    x = x_ref[...].astype(jnp.float32)            # (bt, C, T); also the residual
    w = w_ref[...].astype(jnp.float32)            # (2O, K*C), f = k*C + c
    bias = b_ref[...].astype(jnp.float32)         # (2O, 1)

    # 'same' zero-padding halo: per tap, shift along time (lanes) via an XLU
    # roll and zero the wrapped edge lanes.  One roll/select per tap for the
    # WHOLE (bt, C, T) block -- not per batch element.
    t_idx = jax.lax.broadcasted_iota(jnp.int32, (1, 1, T), 2)
    shifted = []
    for k in range(K):
        d = k - pad
        if d == 0:
            shifted.append(x)
        else:
            valid = (t_idx + d >= 0) & (t_idx + d < T)
            shifted.append(
                jnp.where(valid, pltpu.roll(x, shift=(-d) % T, axis=2), 0.0))

    # Bias-initialized f32 accumulator (no extra bias pass).
    acc = jnp.broadcast_to(bias[None, :, :], (bt, two_o, T))

    if C % 8 == 0:
        # Sublane-tile-aligned channels: fold taps + channels into ONE batched
        # MXU contraction of depth K*C; the rolls above are the im2col.
        xs_all = jnp.concatenate(shifted, axis=1)                 # (bt, K*C, T)
        wb = jnp.broadcast_to(w[None, :, :], (bt, two_o, KC))     # tiny, hoisted
        acc = acc + jnp.einsum('bof,bft->bot', wb, xs_all,
                               preferred_element_type=jnp.float32)
    else:
        # Tiny / unaligned C: aligned sublane stacking isn't available, so run
        # one batched MXU dot per tap (contraction depth C), accumulated in f32.
        for k in range(K):
            wk = jnp.broadcast_to(w[None, :, k * C:(k + 1) * C], (bt, two_o, C))
            acc = acc + jnp.einsum('boc,bct->bot', wk, shifted[k],
                                   preferred_element_type=jnp.float32)

    # GLU + residual (f32 math), then a single dense lane-major block store.
    gated = acc[:, :O, :] * jax.nn.sigmoid(acc[:, O:, :])
    o_ref[...] = (x + gated).astype(o_ref.dtype)


def conv1d_glu(x_nct, weight, bias, *, kernel_size):
    """x_nct: (B, C, T); weight: (2*O, C, K); bias: (2*O,). Returns (B, C, T)."""
    B, C, T = x_nct.shape
    two_o, C_w, K = weight.shape
    assert C_w == C and K == kernel_size
    assert K % 2 == 1, "PyTorch 'same'-length output requires odd kernel_size"
    O = two_o // 2
    assert O == C, "residual connection requires out_channels == in_channels"

    # Only the (tiny) weight/bias are reordered; activations go straight in as
    # NCW with no transpose/pad pass.  Tap-major flattening so that
    # w2d[o, k*C + c] == weight[o, c, k], matching the in-kernel stacking order.
    w2d = jnp.transpose(weight, (0, 2, 1)).reshape(two_o, K * C)
    b_col = bias.reshape(two_o, 1)

    # Batch-tile selection: aim for ~2 MiB of input activations per grid step
    # (in + out are each double-buffered, so pipelined footprint ~4x block;
    # f32 intermediates add a few more x -- comfortably under 32 MiB scoped
    # VMEM even on 64 MiB-total v7x).  Keep >= 2 parallel grid steps whenever
    # B >= 2 so both v7x TensorCores get work.
    per_elem_bytes = C * T * x_nct.dtype.itemsize
    target_bytes = 2 << 20
    bt_cap = max(1, target_bytes // max(per_elem_bytes, 1))
    if B >= 2:
        bt_cap = min(bt_cap, B // 2)
    bt = 1
    for d in range(1, B + 1):
        if B % d == 0 and d <= bt_cap:
            bt = d
    grid = (B // bt,)

    return pl.pallas_call(
        _conv1d_glu_kernel,
        out_shape=jax.ShapeDtypeStruct((B, C, T), x_nct.dtype),
        grid_spec=pltpu.PrefetchScalarGridSpec(
            num_scalar_prefetch=0,
            grid=grid,
            in_specs=[
                pl.BlockSpec((bt, C, T), lambda i: (i, 0, 0)),      # x (and residual)
                pl.BlockSpec((two_o, K * C), lambda i: (0, 0)),     # weights (tap-major)
                pl.BlockSpec((two_o, 1), lambda i: (0, 0)),         # bias
            ],
            out_specs=pl.BlockSpec((bt, C, T), lambda i: (i, 0, 0)),
        ),
        compiler_params=pltpu.CompilerParams(
            dimension_semantics=("parallel",),
            vmem_limit_bytes=32 * 1024 * 1024,
        ),
    )(x_nct, w2d, b_col)


def _reference(x_nct, weight, bias, kernel_size):
    """Pure-JAX reference (lax conv) mirroring the PyTorch forward (eval mode)."""
    pad = (kernel_size - 1) // 2
    y = jax.lax.conv_general_dilated(
        x_nct, weight,
        window_strides=(1,), padding=[(pad, pad)],
        dimension_numbers=("NCH", "OIH", "NCH"))
    y = y + bias[None, :, None]
    O = weight.shape[0] // 2
    x1, x2 = y[:, :O, :], y[:, O:, :]
    return x_nct + x1 * jax.nn.sigmoid(x2)


if __name__ == "__main__":
    # Small shapes consistent with the module: in_channels == out_channels == 4,
    # batch = 2, time steps = 128 (lane-aligned sequence), kernel_size = 3.
    B, C, T, K = 2, 4, 128, 3
    O = C

    key = jax.random.PRNGKey(0)
    kx, kw, kb = jax.random.split(key, 3)

    x = jax.random.normal(kx, (B, C, T), dtype=jnp.float32)

    # Deterministic xavier_uniform-style init (gain=1 for 'linear').
    fan_in, fan_out = C * K, 2 * O * K
    limit = (6.0 / (fan_in + fan_out)) ** 0.5
    weight = jax.random.uniform(kw, (2 * O, C, K), jnp.float32, -limit, limit)
    bias = jax.random.uniform(kb, (2 * O,), jnp.float32, -0.1, 0.1)

    out = conv1d_glu(x, weight, bias, kernel_size=K)
    out = jax.block_until_ready(out)

    ref = _reference(x, weight, bias, K)
    assert out.shape == (B, C, T)
    assert jnp.allclose(out, ref, atol=1e-5, rtol=1e-5), "mismatch vs reference"

    print("KERNEL_OK")
</pallas_src>

<mosaic_0001>
module attributes {stable_mosaic.version = 11 : i64} {
  func.func @_conv1d_glu_kernel(%arg0: i32, %arg1: memref<1x4x128xf32, #tpu.memory_space<vmem>>, %arg2: memref<8x12xf32, #tpu.memory_space<vmem>>, %arg3: memref<8x1xf32, #tpu.memory_space<vmem>>, %arg4: memref<1x4x128xf32, #tpu.memory_space<vmem>>) attributes {dimension_semantics = [#tpu.dimension_semantics<parallel>], iteration_bounds = array<i64: 2>, scalar_prefetch = 0 : i64, scratch_operands = 0 : i64, tpu.core_type = #tpu.core_type<tc>, window_params = [{transform_indices = @transform_0, window_bounds = array<i64: 1, 4, 128>}, {pipeline_mode = #tpu.pipeline_mode<synchronous>, transform_indices = @transform_1, window_bounds = array<i64: 8, 12>}, {pipeline_mode = #tpu.pipeline_mode<synchronous>, transform_indices = @transform_2, window_bounds = array<i64: 8, 1>}, {transform_indices = @transform_3, window_bounds = array<i64: 1, 4, 128>}]} {
    %c0 = arith.constant 0 : index
    %c0_0 = arith.constant 0 : index
    %c0_1 = arith.constant 0 : index
    %0 = vector.load %arg1[%c0, %c0_0, %c0_1] : memref<1x4x128xf32, #tpu.memory_space<vmem>>, vector<1x4x128xf32>
    %c0_2 = arith.constant 0 : index
    %c0_3 = arith.constant 0 : index
    %1 = vector.load %arg2[%c0_2, %c0_3] : memref<8x12xf32, #tpu.memory_space<vmem>>, vector<8x12xf32>
    %c0_4 = arith.constant 0 : index
    %c0_5 = arith.constant 0 : index
    %2 = vector.load %arg3[%c0_4, %c0_5] : memref<8x1xf32, #tpu.memory_space<vmem>>, vector<8x1xf32>
    %3 = tpu.iota {dimensions = array<i32: 2>} : vector<1x1x128xi32>
    %c-1_i32 = arith.constant -1 : i32
    %4 = vector.broadcast %c-1_i32 : i32 to vector<1x1x128xi32>
    %5 = arith.addi %3, %4 : vector<1x1x128xi32>
    %c0_i32 = arith.constant 0 : i32
    %6 = vector.broadcast %c0_i32 : i32 to vector<1x1x128xi32>
    %7 = arith.cmpi sge, %5, %6 : vector<1x1x128xi32>
    %c-1_i32_6 = arith.constant -1 : i32
    %8 = vector.broadcast %c-1_i32_6 : i32 to vector<1x1x128xi32>
    %9 = arith.addi %3, %8 : vector<1x1x128xi32>
    %c128_i32 = arith.constant 128 : i32
    %10 = vector.broadcast %c128_i32 : i32 to vector<1x1x128xi32>
    %11 = arith.cmpi slt, %9, %10 : vector<1x1x128xi32>
    %12 = arith.andi %7, %11 : vector<1x1x128xi1>
    %c1_i32 = arith.constant 1 : i32
    %13 = tpu.dynamic_rotate %0 by %c1_i32 dim 2 : vector<1x4x128xf32>, i32 -> vector<1x4x128xf32>
    %cst = arith.constant 0.000000e+00 : f32
    %14 = vector.shape_cast %12 : vector<1x1x128xi1> to vector<1x1x128xi1>
    %15 = vector.broadcast %14 : vector<1x1x128xi1> to vector<1x4x128xi1>
    %16 = vector.broadcast %cst : f32 to vector<1x4x128xf32>
    %17 = arith.select %15, %13, %16 : vector<1x4x128xi1>, vector<1x4x128xf32>
    %c1_i32_7 = arith.constant 1 : i32
    %18 = vector.broadcast %c1_i32_7 : i32 to vector<1x1x128xi32>
    %19 = arith.addi %3, %18 : vector<1x1x128xi32>
    %c0_i32_8 = arith.constant 0 : i32
    %20 = vector.broadcast %c0_i32_8 : i32 to vector<1x1x128xi32>
    %21 = arith.cmpi sge, %19, %20 : vector<1x1x128xi32>
    %c1_i32_9 = arith.constant 1 : i32
    %22 = vector.broadcast %c1_i32_9 : i32 to vector<1x1x128xi32>
    %23 = arith.addi %3, %22 : vector<1x1x128xi32>
    %c128_i32_10 = arith.constant 128 : i32
    %24 = vector.broadcast %c128_i32_10 : i32 to vector<1x1x128xi32>
    %25 = arith.cmpi slt, %23, %24 : vector<1x1x128xi32>
    %26 = arith.andi %21, %25 : vector<1x1x128xi1>
    %c127_i32 = arith.constant 127 : i32
    %27 = tpu.dynamic_rotate %0 by %c127_i32 dim 2 : vector<1x4x128xf32>, i32 -> vector<1x4x128xf32>
    %cst_11 = arith.constant 0.000000e+00 : f32
    %28 = vector.shape_cast %26 : vector<1x1x128xi1> to vector<1x1x128xi1>
    %29 = vector.broadcast %28 : vector<1x1x128xi1> to vector<1x4x128xi1>
    %30 = vector.broadcast %cst_11 : f32 to vector<1x4x128xf32>
    %31 = arith.select %29, %27, %30 : vector<1x4x128xi1>, vector<1x4x128xf32>
    %32 = vector.shape_cast %2 : vector<8x1xf32> to vector<1x8x1xf32>
    %33 = vector.shape_cast %32 : vector<1x8x1xf32> to vector<1x8x1xf32>
    %34 = vector.broadcast %33 : vector<1x8x1xf32> to vector<1x8x128xf32>
    %35 = vector.extract_strided_slice %1 {offsets = [0, 0], sizes = [8, 4], strides = [1, 1]} : vector<8x12xf32> to vector<8x4xf32>
    %36 = vector.shape_cast %35 : vector<8x4xf32> to vector<1x8x4xf32>
    "tpu.trace_start"() <{level = 10 : i32, message = "boc,bct->bot"}> : () -> ()
    %cst_12 = arith.constant dense<0.000000e+00> : vector<1x8x128xf32>
    %37 = tpu.matmul %36, %17, %cst_12 {dimension_numbers = #tpu.dot_dimension_numbers<[2], [1], [1], [2], [0, 0, 0, 1, 1, 2], [0], [0]>} : vector<1x8x4xf32>, vector<1x4x128xf32>, vector<1x8x128xf32> -> vector<1x8x128xf32>
    "tpu.trace_stop"() : () -> ()
    %38 = arith.addf %34, %37 : vector<1x8x128xf32>
    %39 = vector.extract_strided_slice %1 {offsets = [0, 4], sizes = [8, 4], strides = [1, 1]} : vector<8x12xf32> to vector<8x4xf32>
    %40 = vector.shape_cast %39 : vector<8x4xf32> to vector<1x8x4xf32>
    "tpu.trace_start"() <{level = 10 : i32, message = "boc,bct->bot"}> : () -> ()
    %cst_13 = arith.constant dense<0.000000e+00> : vector<1x8x128xf32>
    %41 = tpu.matmul %40, %0, %cst_13 {dimension_numbers = #tpu.dot_dimension_numbers<[2], [1], [1], [2], [0, 0, 0, 1, 1, 2], [0], [0]>} : vector<1x8x4xf32>, vector<1x4x128xf32>, vector<1x8x128xf32> -> vector<1x8x128xf32>
    "tpu.trace_stop"() : () -> ()
    %42 = arith.addf %38, %41 : vector<1x8x128xf32>
    %43 = vector.extract_strided_slice %1 {offsets = [0, 8], sizes = [8, 4], strides = [1, 1]} : vector<8x12xf32> to vector<8x4xf32>
    %44 = vector.shape_cast %43 : vector<8x4xf32> to vector<1x8x4xf32>
    "tpu.trace_start"() <{level = 10 : i32, message = "boc,bct->bot"}> : () -> ()
    %cst_14 = arith.constant dense<0.000000e+00> : vector<1x8x128xf32>
    %45 = tpu.matmul %44, %31, %cst_14 {dimension_numbers = #tpu.dot_dimension_numbers<[2], [1], [1], [2], [0, 0, 0, 1, 1, 2], [0], [0]>} : vector<1x8x4xf32>, vector<1x4x128xf32>, vector<1x8x128xf32> -> vector<1x8x128xf32>
    "tpu.trace_stop"() : () -> ()
    %46 = arith.addf %42, %45 : vector<1x8x128xf32>
    %47 = vector.extract_strided_slice %46 {offsets = [0, 0, 0], sizes = [1, 4, 128], strides = [1, 1, 1]} : vector<1x8x128xf32> to vector<1x4x128xf32>
    %48 = vector.extract_strided_slice %46 {offsets = [0, 4, 0], sizes = [1, 4, 128], strides = [1, 1, 1]} : vector<1x8x128xf32> to vector<1x4x128xf32>
    %49 = arith.negf %48 : vector<1x4x128xf32>
    %50 = math.exp %49 : vector<1x4x128xf32>
    %cst_15 = arith.constant 1.000000e+00 : f32
    %51 = vector.broadcast %cst_15 : f32 to vector<1x4x128xf32>
    %52 = arith.addf %51, %50 : vector<1x4x128xf32>
    %53 = arith.divf %51, %52 : vector<1x4x128xf32>
    %54 = arith.mulf %47, %53 : vector<1x4x128xf32>
    %55 = arith.addf %0, %54 : vector<1x4x128xf32>
    %c0_16 = arith.constant 0 : index
    %c0_17 = arith.constant 0 : index
    %c0_18 = arith.constant 0 : index
    %56 = vector.load %arg4[%c0_16, %c0_17, %c0_18] : memref<1x4x128xf32, #tpu.memory_space<vmem>>, vector<1x4x128xf32>
    tpu.vector_store %arg4[%c0_16, %c0_17, %c0_18], %55 {strides = array<i32>} : memref<1x4x128xf32, #tpu.memory_space<vmem>>, vector<1x4x128xf32>,
    return
  }
  func.func @transform_0(%arg0: i32) -> (i32, i32, i32) {
    %c0_i32 = arith.constant 0 : i32
    %c0_i32_0 = arith.constant 0 : i32
    %c0_i32_1 = arith.constant 0 : i32
    return %arg0, %c0_i32, %c0_i32_0 : i32, i32, i32
  }
  func.func @transform_1(%arg0: i32) -> (i32, i32) {
    %c0_i32 = arith.constant 0 : i32
    %c0_i32_0 = arith.constant 0 : i32
    %c0_i32_1 = arith.constant 0 : i32
    return %c0_i32, %c0_i32_0 : i32, i32
  }
  func.func @transform_2(%arg0: i32) -> (i32, i32) {
    %c0_i32 = arith.constant 0 : i32
    %c0_i32_0 = arith.constant 0 : i32
    %c0_i32_1 = arith.constant 0 : i32
    return %c0_i32, %c0_i32_0 : i32, i32
  }
  func.func @transform_3(%arg0: i32) -> (i32, i32, i32) {
    %c0_i32 = arith.constant 0 : i32
    %c0_i32_0 = arith.constant 0 : i32
    %c0_i32_1 = arith.constant 0 : i32
    return %arg0, %c0_i32, %c0_i32_0 : i32, i32, i32
  }
}

</mosaic_0001>

<llo_original>
// kernel: tpu_custom_call.1
$region0: #{tpu_custom_call.1}
  #allocation0 [shape = 'u32[]', space=smem, size = 0x4, offset = 0x4, fixed_abs, tag = 'smem constant byte address 0x4 - core index']
  #allocation1 [shape = 'u32[72,128]{1,0:T(1,128)}', space=vmem, size = 0x9000, scoped, tag = 'internal scratch']
  %s0 = inlined_call_operand.vmem [shape: f32[2,4,128], index: 0, kind: input, shape index: {}]
  %s1 = inlined_call_operand.hbm [shape: f32[8,12], index: 1, kind: input, shape index: {}]
  %s2 = inlined_call_operand.vmem [shape: f32[8,1], index: 2, kind: input, shape index: {}]
  %s3 = inlined_call_operand.hbm [shape: f32[2,4,128], index: 3, kind: output, shape index: {}]
  %s4 = sld [smem:[#allocation0]]
  $region49: #{tpu_custom_call.1} parent=0
    _
  %s6 = ssub.s32 1, %s4
  %s7 = scalar_select 0, %s6, %s4
  $region1: #{tpu_custom_call.1} parent=0
    #allocation2 [shape = 'u8[4096]{0}', space=vmem, size = 0x1000, scoped, tag = 'input window, operand 1, single buffered']
    #allocation3 [shape = 's32[2]{0}', space=sflag, size = 0x8, scoped, tag = 'scoped memory for tpu_custom_call.1']
    #allocation4 [shape = 's32[2]{0}', space=sflag, size = 0x8, scoped, tag = 'scoped memory for tpu_custom_call.1']
    #allocation5 [shape = 'u8[4096]{0}', space=vmem, size = 0x1000, scoped, tag = 'output window, operand 0']
    %8 = vsyncpa [#allocation3], 0
    %9 = vsyncpa [#allocation4], 0
    %s10 = scalar_lea.sflag [#allocation4], 1
    %11 = vsyncpa %s10, 0
    loop: start=0, step=1, limit=4
    $region2: #{tpu_custom_call.1} parent=1 // loop_pre_header
      _
    $region3: #{tpu_custom_call.1} parent=1 // loop_header
      %s13 = sphi 0, %s17
      %p14 = scmp.ge.s32.totalorder %s13, 4
      %s23 = sphi 0, %s25
      %s26 = sphi 0, %s23
      %s27 = sphi 0, %s26
      %s43 = sphi 0, %s27
      %s47 = sphi 0, %s47
      %s49 = sphi 0, %s47
      %s50 = sphi 0, %s49
      %s64 = sphi 0, %s50
      %s68 = sphi 0, %s68
      %s70 = sphi 0, %s68
      %s71 = sphi 0, %s70
      %s85 = sphi 0, %s71
      %s91 = sphi 0, %s93
      %s94 = sphi 0, %s91
      %s95 = sphi 0, %s94
      %s111 = sphi 0, %s95
    $region4: #{tpu_custom_call.1} parent=1 // loop_header_branch
      %16 = sbr.rel (%p14) target = $region8
    $region5: #{tpu_custom_call.1} parent=1 // loop_body
      %s18 = ssub.s32 %s13, 1
      %s19 = ssub.s32 %s13, 2
      %s20 = sadd.s32 %s13, 1
      %s21 = ssub.s32 %s13, %s20
      %p22 = scmp.eq.s32.totalorder %s21, 0
      %s24 = sadd.s32 %s23, 1
      %s25 = scalar_select %p22, %s23, %s24
      %p28 = pneg %p22
      %p29 = scmp.eq.s32.totalorder %s13, 1
      %p30 = por %p28, %p29
      %p31 = scmp.ne.s32.totalorder %s23, %s26
      %p32 = scmp.eq.s32.totalorder %s13, 0
      %p33 = por %p31, %p32
      %p34 = scmp.ne.s32.totalorder %s23, %s26
      %p35 = scmp.eq.s32.totalorder %s18, 1
      %p36 = por %p34, %p35
      %p37 = scmp.ne.s32.totalorder %s26, %s27
      %p38 = scmp.eq.s32.totalorder %s18, 0
      %p39 = por %p37, %p38
      %p40 = scmp.ne.s32.totalorder %s26, %s27
      %p41 = scmp.eq.s32.totalorder %s19, 1
      %p42 = por %p40, %p41
      %p44 = scmp.ne.s32.totalorder %s27, %s43
      %p45 = scmp.eq.s32.totalorder %s19, 0
      %p46 = por %p44, %p45
      %s48 = sadd.s32 %s47, 1
      %p51 = scmp.eq.s32.totalorder %s13, 1
      %p52 = scmp.ne.s32.totalorder %s47, %s49
      %p53 = scmp.eq.s32.totalorder %s13, 0
      %p54 = por %p52, %p53
      %p55 = scmp.ne.s32.totalorder %s47, %s49
      %p56 = scmp.eq.s32.totalorder %s18, 1
      %p57 = por %p55, %p56
      %p58 = scmp.ne.s32.totalorder %s49, %s50
      %p59 = scmp.eq.s32.totalorder %s18, 0
      %p60 = por %p58, %p59
      %p61 = scmp.ne.s32.totalorder %s49, %s50
      %p62 = scmp.eq.s32.totalorder %s19, 1
      %p63 = por %p61, %p62
      %p65 = scmp.ne.s32.totalorder %s50, %s64
      %p66 = scmp.eq.s32.totalorder %s19, 0
      %p67 = por %p65, %p66
      %s69 = sadd.s32 %s68, 1
      %p72 = scmp.eq.s32.totalorder %s13, 1
      %p73 = scmp.ne.s32.totalorder %s68, %s70
      %p74 = scmp.eq.s32.totalorder %s13, 0
      %p75 = por %p73, %p74
      %p76 = scmp.ne.s32.totalorder %s68, %s70
      %p77 = scmp.eq.s32.totalorder %s18, 1
      %p78 = por %p76, %p77
      %p79 = scmp.ne.s32.totalorder %s70, %s71
      %p80 = scmp.eq.s32.totalorder %s18, 0
      %p81 = por %p79, %p80
      %p82 = scmp.ne.s32.totalorder %s70, %s71
      %p83 = scmp.eq.s32.totalorder %s19, 1
      %p84 = por %p82, %p83
      %p86 = scmp.ne.s32.totalorder %s71, %s85
      %p87 = scmp.eq.s32.totalorder %s19, 0
      %p88 = por %p86, %p87
      %s89 = ssub.s32 %s13, %s20
      %p90 = scmp.eq.s32.totalorder %s89, 0
      %s92 = sadd.s32 %s91, 1
      %s93 = scalar_select %p90, %s91, %s92
      %p96 = pneg %p90
      %p97 = scmp.eq.s32.totalorder %s13, 1
      %p98 = por %p96, %p97
      %p99 = scmp.ne.s32.totalorder %s91, %s94
      %p100 = scmp.eq.s32.totalorder %s13, 0
      %p101 = por %p99, %p100
      %p102 = scmp.ne.s32.totalorder %s91, %s94
      %p103 = scmp.eq.s32.totalorder %s18, 1
      %p104 = por %p102, %p103
      %p105 = scmp.ne.s32.totalorder %s94, %s95
      %p106 = scmp.eq.s32.totalorder %s18, 0
      %p107 = por %p105, %p106
      %p108 = scmp.ne.s32.totalorder %s94, %s95
      %p109 = scmp.eq.s32.totalorder %s19, 1
      %p110 = por %p108, %p109
      %p112 = scmp.ne.s32.totalorder %s95, %s111
      %p113 = scmp.eq.s32.totalorder %s19, 0
      %p114 = por %p112, %p113
      %p115 = scmp.le.s32.totalorder 1, %s13
      %p116 = scmp.lt.s32.totalorder %s13, 3
      %p117 = pnand %p115, %p116
      %p118 = pneg %p117
      // Predicated region
      $region9: #{tpu_custom_call.1} parent=5 // pred_check
        _
      $region10: #{tpu_custom_call.1} parent=5 // pred_check_branch
        %120 = sbr.rel (%p117) target = $region12
      $region11: #{tpu_custom_call.1} parent=5 // pred_region
        %s121 = ssub.s32 %s13, 1
        // Predicated region
        $region13: #{tpu_custom_call.1} parent=11 // pred_check
          %p122 = pneg %p60
        $region14: #{tpu_custom_call.1} parent=11 // pred_check_branch
          %124 = sbr.rel (%p122) target = $region16
        $region15: #{tpu_custom_call.1} parent=11 // pred_region
          %126 = vsyncadd [#allocation3], 0
          %s128 = sshll.u32 %s1, 4
          %s129 = int_to_ptr.hbm [resolvable:$true] %s128
          %s130 = sshll.u32 [#allocation2], 4
          %s131 = int_to_ptr.vmem [resolvable:$true] %s130
          %133 = dma.hbm_to_vmem [thread:$0]  %s129, 128, %s131, [#allocation3]
        $region16: #{tpu_custom_call.1} parent=11 // pred_fallthru
          _
        // Predicated region
        $region17: #{tpu_custom_call.1} parent=11 // pred_check
          %p134 = pneg %p81
        $region18: #{tpu_custom_call.1} parent=11 // pred_check_branch
          %136 = sbr.rel (%p134) target = $region20
        $region19: #{tpu_custom_call.1} parent=11 // pred_region
          _
        $region20: #{tpu_custom_call.1} parent=11 // pred_fallthru
          _
      $region12: #{tpu_custom_call.1} parent=5 // pred_fallthru
        _
      %p137 = scmp.lt.s32.totalorder %s13, 2
      // Predicated region
      $region21: #{tpu_custom_call.1} parent=5 // pred_check
        %p138 = pneg %p137
      $region22: #{tpu_custom_call.1} parent=5 // pred_check_branch
        %140 = sbr.rel (%p138) target = $region24
      $region23: #{tpu_custom_call.1} parent=5 // pred_region
        // Predicated region
        $region25: #{tpu_custom_call.1} parent=23 // pred_check
          %p141 = pneg %p33
        $region26: #{tpu_custom_call.1} parent=23 // pred_check_branch
          %143 = sbr.rel (%p141) target = $region28
        $region27: #{tpu_custom_call.1} parent=23 // pred_region
          %p144 = scmp.lt.s32.totalorder %s13, 1
          %s145 = scalar_select %p144, %s13, 1
          %s146 = smul.addr %s145, 4
          %s147 = scalar_lea.vmem %s0, %s146
        $region28: #{tpu_custom_call.1} parent=23 // pred_fallthru
          _
      $region24: #{tpu_custom_call.1} parent=5 // pred_fallthru
        _
      %p148 = scmp.le.s32.totalorder 1, %s13
      %p149 = scmp.lt.s32.totalorder %s13, 3
      %p150 = pnand %p148, %p149
      %p151 = pneg %p150
      // Predicated region
      $region29: #{tpu_custom_call.1} parent=5 // pred_check
        _
      $region30: #{tpu_custom_call.1} parent=5 // pred_check_branch
        %153 = sbr.rel (%p150) target = $region32
      $region31: #{tpu_custom_call.1} parent=5 // pred_region
        %s154 = ssub.s32 %s13, 1
        // Predicated region
        $region33: #{tpu_custom_call.1} parent=31 // pred_check
          %p155 = pneg %p60
        $region34: #{tpu_custom_call.1} parent=31 // pred_check_branch
          %157 = sbr.rel (%p155) target = $region36
        $region35: #{tpu_custom_call.1} parent=31 // pred_region
          %159 = dma.done [#allocation3], 128
        $region36: #{tpu_custom_call.1} parent=31 // pred_fallthru
          _
        %p160 = scmp.lt.s32.totalorder %s18, 1
        %s161 = scalar_select %p160, %s18, 1
        %s162 = smul.addr %s161, 4
        %s163 = scalar_lea.vmem %s0, %s162
        %p164 = pneg %p39
        %p165 = pneg %p36
        %p166 = pneg %p60
        %p167 = pneg %p57
        %p168 = pneg %p81
        %p169 = pneg %p78
        %p170 = pneg %p107
        %p171 = pneg %p104
        %s172 = sand.u32 %s94, 1
        %s173 = scalar_lea.sflag [#allocation4], %s172
        %s174 = sand.u32 %s94, 1
        %s175 = smul.addr %s174, 4
        %s176 = scalar_lea.vmem [#allocation5], %s175
        %p177 = scmp.lt.s32.totalorder %s18, 1
        %s178 = scalar_select %p177, %s18, 1
        %s179 = smul.addr %s178, 4
        %s180 = scalar_lea.vmem %s0, %s179
        %v181 = vld [vmem:[%s180] sm:$0xf]
        %v182 = vld [vmem:[#allocation2] sm:$0xff]
        %v183 = vld [vmem:[%s2] sm:$0xff]
        %v184 = vlaneseq
        %v185 = vand.u32 %v184, 127
        %v186 = vadd.s32 %v185, 4294967295
        %vm187 = vcmp.ge.s32.totalorder %v186, 0
        %vm188 = vcmp.lt.s32.totalorder %v186, 128
        %vm189 = vmand %vm187, %vm188
        %190 = vrot.lane.b32.xlu0 %v181, 1
        %v191 = vpop.permute.xlu0 %190
        %v192 = vsel %vm189, 1, 0
        %vm193 = vcmp.eq.s32.totalorder %v192, 1
        %v194 = vsel %vm193, %v191, 0.0
        %v195 = vadd.s32 %v185, 1
        %vm196 = vcmp.ge.s32.totalorder %v195, 0
        %vm197 = vcmp.lt.s32.totalorder %v195, 128
        %vm198 = vmand %vm196, %vm197
        %199 = vrot.lane.b32.xlu0 %v181, 127
        %v200 = vpop.permute.xlu0 %199
        %v201 = vsel %vm198, 1, 0
        %vm202 = vcmp.eq.s32.totalorder %v201, 1
        %v203 = vsel %vm202, %v200, 0.0
        %205 = vset.pattern.permute.xlu0 0
        %206 = vperm.xlu0 %205, %v183
        %v207 = vpop.permute.xlu0 %206
        %vm209 = vcmask 31744
        %v211 = vsel %vm209, %v182, 0
        %vm213 = vcmask 1043456
        %v215 = vsel %vm213, %v194, 0
        %217 = vmatpush.msra.mxu0 0.0
        %218 = vmatpush.msra.mxu0 0.0
        %219 = vmatpush.msra.mxu0 0.0
        %220 = vmatpush.msra.mxu0 0.0
        %221 = vmatpush.msra.mxu0 0.0
        %222 = vmatpush.msra.mxu0 0.0
        %223 = vmatpush.msra.mxu0 0.0
        %224 = vmatpush.msra.mxu0 0.0
        %225 = vmatpush.msra.mxu0 0.0
        %226 = vmatpush.msra.mxu0 0.0
        %227 = vmatpush.msra.mxu0 0.0
        %228 = vmatpush.msra.mxu0 0.0
        %229 = vmatpush.msra.mxu0 0.0
        %230 = vmatpush.msra.mxu0 0.0
        %231 = vmatpush.msra.mxu0 0.0
        %232 = vmatpush.msra.mxu0 %v215
        %233 = vmatmul.f32.gmra.mxu0 %v211
        %v234 = vpop.f32.mrf.mxu0
        %v235 = vadd.f32 0.0, %v234
        %236 = vdwg.mxu0
        %v237 = vadd.f32 %v207, %v235
        %238 = vrot.lane.b32.xlu0 %v182, 124
        %v239 = vpop.permute.xlu0 %238
        %v240 = vsel %vm209, %v239, 0
        %v243 = vsel %vm213, %v181, 0
        %245 = vmatpush.msra.mxu0 0.0
        %246 = vmatpush.msra.mxu0 0.0
        %247 = vmatpush.msra.mxu0 0.0
        %248 = vmatpush.msra.mxu0 0.0
        %249 = vmatpush.msra.mxu0 0.0
        %250 = vmatpush.msra.mxu0 0.0
        %251 = vmatpush.msra.mxu0 0.0
        %252 = vmatpush.msra.mxu0 0.0
        %253 = vmatpush.msra.mxu0 0.0
        %254 = vmatpush.msra.mxu0 0.0
        %255 = vmatpush.msra.mxu0 0.0
        %256 = vmatpush.msra.mxu0 0.0
        %257 = vmatpush.msra.mxu0 0.0
        %258 = vmatpush.msra.mxu0 0.0
        %259 = vmatpush.msra.mxu0 0.0
        %260 = vmatpush.msra.mxu0 %v243
        %261 = vmatmul.f32.gmra.mxu0 %v240
        %v262 = vpop.f32.mrf.mxu0
        %v263 = vadd.f32 0.0, %v262
        %264 = vdwg.mxu0
        %v265 = vadd.f32 %v237, %v263
        %266 = vrot.lane.b32.xlu0 %v182, 120
        %v267 = vpop.permute.xlu0 %266
        %v268 = vsel %vm209, %v267, 0
        %v271 = vsel %vm213, %v203, 0
        %273 = vmatpush.msra.mxu0 0.0
        %274 = vmatpush.msra.mxu0 0.0
        %275 = vmatpush.msra.mxu0 0.0
        %276 = vmatpush.msra.mxu0 0.0
        %277 = vmatpush.msra.mxu0 0.0
        %278 = vmatpush.msra.mxu0 0.0
        %279 = vmatpush.msra.mxu0 0.0
        %280 = vmatpush.msra.mxu0 0.0
        %281 = vmatpush.msra.mxu0 0.0
        %282 = vmatpush.msra.mxu0 0.0
        %283 = vmatpush.msra.mxu0 0.0
        %284 = vmatpush.msra.mxu0 0.0
        %285 = vmatpush.msra.mxu0 0.0
        %286 = vmatpush.msra.mxu0 0.0
        %287 = vmatpush.msra.mxu0 0.0
        %288 = vmatpush.msra.mxu0 %v271
        %289 = vmatmul.f32.gmra.mxu0 %v268
        %v290 = vpop.f32.mrf.mxu0
        %v291 = vadd.f32 0.0, %v290
        %292 = vdwg.mxu0
        %v293 = vadd.f32 %v265, %v291
        %v294 = vxor.u32 %v293, 2147483648
        %v295 = vmul.f32 %v294, 1.442695
        %v296 = vpow.pop %v295
        %v297 = vadd.f32 %v296, 1.0
        %v298 = vrcp.pop %v297
        %v299 = vmul.f32 %v297, %v298
        %v300 = vsub.f32 1.0, %v299
        %v301 = vmul.f32 %v298, %v300
        %v302 = vadd.f32 %v298, %v301
        %vm303 = vweird.f32 %v297
        %vm304 = vweird.f32 %v298
        %vm305 = vmor %vm303, %vm304
        %v306 = vsel %vm305, %v298, %v302
        %v307 = vand.u32 2147483647, %v297
        %vm308 = vcmp.eq.f32.partialorder %v307, 8.507059e+37
        %v309 = vand.u32 %v297, 2147483648
        %v310 = vor.u32 1.1754944e-38, %v309
        %v311 = vsel %vm308, %v310, %v306
        %v312 = vmul.f32 1.0, %v311
        %v314 = vrot.slane %v312, 4
        %v316 = vmul.f32 %v293, %v314
        %v317 = vadd.f32 %v181, %v316
        %318 = vst [vmem:[%s176] sm:$0xf] %v317
        %s319 = sand.u32 %s94, 1
        %s320 = scalar_lea.sflag [#allocation4], %s319
        %s321 = sand.u32 %s94, 1
        %s322 = smul.addr %s321, 4
        %s323 = scalar_lea.vmem [#allocation5], %s322
        // Predicated region
        $region37: #{tpu_custom_call.1} parent=31 // pred_check
          %p324 = pneg %p104
        $region38: #{tpu_custom_call.1} parent=31 // pred_check_branch
          %326 = sbr.rel (%p324) target = $region40
        $region39: #{tpu_custom_call.1} parent=31 // pred_region
          %328 = vsyncadd %s320, 0
          %s329 = smul.addr %s18, 4
          %s330 = scalar_lea.hbm %s3, %s329
          %s332 = sshll.u32 %s323, 4
          %s333 = int_to_ptr.vmem [resolvable:$true] %s332
          %s334 = sshll.u32 %s330, 4
          %s335 = int_to_ptr.hbm [resolvable:$true] %s334
          %337 = dma.vmem_to_hbm [thread:$0]  %s333, 64, %s335, %s320
        $region40: #{tpu_custom_call.1} parent=31 // pred_fallthru
          _
      $region32: #{tpu_custom_call.1} parent=5 // pred_fallthru
        _
      %p338 = scmp.le.s32.totalorder 2, %s13
      // Predicated region
      $region41: #{tpu_custom_call.1} parent=5 // pred_check
        %p339 = pneg %p338
      $region42: #{tpu_custom_call.1} parent=5 // pred_check_branch
        %341 = sbr.rel (%p339) target = $region44
      $region43: #{tpu_custom_call.1} parent=5 // pred_region
        %s342 = ssub.s32 %s13, 2
        // Predicated region
        $region45: #{tpu_custom_call.1} parent=43 // pred_check
          %p343 = pneg %p110
        $region46: #{tpu_custom_call.1} parent=43 // pred_check_branch
          %345 = sbr.rel (%p343) target = $region48
        $region47: #{tpu_custom_call.1} parent=43 // pred_region
          %s346 = sand.u32 %s95, 1
          %s347 = scalar_lea.sflag [#allocation4], %s346
          %s348 = sand.u32 %s95, 1
          %s349 = smul.addr %s348, 4
          %s350 = scalar_lea.vmem [#allocation5], %s349
          %352 = dma.done %s347, 64
        $region48: #{tpu_custom_call.1} parent=43 // pred_fallthru
          _
      $region44: #{tpu_custom_call.1} parent=5 // pred_fallthru
        _
    $region6: #{tpu_custom_call.1} parent=1 // loop_footer
      %s17 = sadd.s32 1, %s13
    $region7: #{tpu_custom_call.1} parent=1 // loop_footer_branch
      %12 = sbr.rel target = $region3
    $region8: #{tpu_custom_call.1} parent=1 // loop_exit
      _
    %353 = vsyncpa [#allocation3], 1
    %s354 = scalar_lea.sflag [#allocation3], 1
    %355 = vsyncpa %s354, 1
    %356 = vsyncpa [#allocation4], 1
    %s357 = scalar_lea.sflag [#allocation4], 1
    %358 = vsyncpa %s357, 1

</llo_original>
